<compile_context>
chip_gen: v7x
topology: tpu7x:2x2x1
jax: 0.10.0
libtpu: 0.0.40
codegen_flags: <defaults>
</compile_context>

<pallas_src>
import jax
import jax.numpy as jnp
from jax.experimental import pallas as pl
from jax.experimental.pallas import tpu as pltpu

LANES = 128
MAX_TILE_ROWS = 1024


def _layout(n):
    """(rows, tile_rows, pad_elems) for n flattened elements."""
    rows = -(-n // LANES)
    pad = rows * LANES - n              # only nonzero when n % 128 != 0
    tile_rows = min(MAX_TILE_ROWS, rows)  # < MAX only when it equals full dim
    return rows, tile_rows, pad


def _make_kernel(tile_rows, rows_valid, tiles_per_split, needs_mask):
    """Grid = (split p [parallel], tile k [arbitrary/reduction])."""

    def kernel(xhat_ref, yhat_ref, x_ref, sigma_ref, mask_ref,
               accx_ref, accy_ref, accm_ref):
        k = pl.program_id(1)

        @pl.when(k == 0)
        def _init():
            accx_ref[...] = jnp.zeros_like(accx_ref)
            accy_ref[...] = jnp.zeros_like(accy_ref)
            accm_ref[...] = jnp.zeros_like(accm_ref)

        # Cast in-register (inputs may be bf16 / int8 in HBM; compute in f32).
        xh = xhat_ref[...].astype(jnp.float32)
        yh = yhat_ref[...].astype(jnp.float32)
        xx = x_ref[...].astype(jnp.float32)
        sg = sigma_ref[...].astype(jnp.float32)
        m = mask_ref[...].astype(jnp.float32)

        inv_sg = pl.reciprocal(sg, approx=False)   # EUP slot, exact
        rx = (xh - xx) * inv_sg
        ry = yh - xx
        cx = m * rx * rx
        cy = m * ry * ry

        if needs_mask:
            # Partial tail block / megacore overhang block: zero every row that
            # lies past the valid data.  Must be a select (0 * inf == NaN).
            p = pl.program_id(0)
            start_row = (p * tiles_per_split + k) * tile_rows
            row_id = jax.lax.broadcasted_iota(
                jnp.int32, (tile_rows, LANES), 0) + start_row
            valid = row_id < rows_valid
            zero = jnp.zeros_like(cx)
            cx = jnp.where(valid, cx, zero)
            cy = jnp.where(valid, cy, zero)
            m = jnp.where(valid, m, zero)

        # Reduce the (tile_rows, 128) tile to a lane-dense (1, 128) partial
        # (VALU/XLU work, hidden under the 5-stream input DMA) and accumulate.
        accx_ref[...] += cx.sum(axis=0, keepdims=True)
        accy_ref[...] += cy.sum(axis=0, keepdims=True)
        accm_ref[...] += m.sum(axis=0, keepdims=True)

    return kernel


def masked_denoising_loss(x_hat, y_hat, x, sigma, mask):
    """Concrete LossFunction.forward(x_hat, y_hat, x, sigma, mask)."""
    n = x_hat.size
    rows, tile_rows, pad = _layout(n)

    # Stream bool masks as int8 (1 B/elem) instead of upcasting to f32.
    if mask.dtype == jnp.bool_:
        mask = mask.astype(jnp.int8)

    def prep(a, pad_val):
        a = a.reshape(-1)                       # free reshape
        if pad:                                 # only when n % 128 != 0
            a = jnp.pad(a, (0, pad), constant_values=pad_val)
        return a.reshape(rows, LANES)           # free reshape

    xh = prep(x_hat, 0)
    yh = prep(y_hat, 0)
    xx = prep(x, 0)
    sg = prep(sigma, 1)     # pad sigma with 1 -> padded lanes contribute 0
    mk = prep(mask, 0)      # padded lanes masked out

    total_tiles = -(-rows // tile_rows)
    # Always split 2-way when there is >= 2 tiles of work: v7x megacore shards
    # the p axis across its two TensorCores; on 1-TC chips it is a cheap
    # serial outer loop (one extra (1,128) accumulator init / writeback).
    num_splits = 2 if total_tiles >= 2 else 1
    tiles_per_split = -(-total_tiles // num_splits)
    has_overhang = num_splits * tiles_per_split != total_tiles
    needs_mask = (total_tiles * tile_rows != rows) or has_overhang

    if has_overhang:
        def in_idx(p, k):
            return (jnp.minimum(p * tiles_per_split + k, total_tiles - 1), 0)
    else:
        def in_idx(p, k):
            return (p * tiles_per_split + k, 0)

    in_spec = pl.BlockSpec((tile_rows, LANES), in_idx)
    out_spec = pl.BlockSpec((None, 1, LANES), lambda p, k: (p, 0, 0))
    out_shape = jax.ShapeDtypeStruct((num_splits, 1, LANES), jnp.float32)

    kernel = _make_kernel(tile_rows, rows, tiles_per_split, needs_mask)

    accx, accy, accm = pl.pallas_call(
        kernel,
        out_shape=[out_shape] * 3,
        grid_spec=pltpu.PrefetchScalarGridSpec(
            num_scalar_prefetch=0,
            grid=(num_splits, tiles_per_split),
            in_specs=[in_spec] * 5,
            out_specs=[out_spec] * 3,
        ),
        compiler_params=pltpu.CompilerParams(
            dimension_semantics=("parallel", "arbitrary"),
            vmem_limit_bytes=32 * 1024 * 1024),
    )(xh, yh, xx, sg, mk)

    # Single fused tiny cross-lane reduction (3 x num_splits x 128 f32) in XLA.
    sums = jnp.sum(jnp.stack([accx, accy, accm]), axis=(1, 2, 3))
    denom = jnp.maximum(sums[2], 1.0)
    loss_x = sums[0] / denom
    loss_y = sums[1] / denom
    return loss_x + loss_y, loss_x, loss_y


def _reference(x_hat, y_hat, x, sigma, mask):
    f = lambda a: a.astype(jnp.float32)
    m = f(mask)
    denom = jnp.maximum(jnp.sum(m), 1.0)
    loss_x = jnp.sum(m * ((f(x_hat) - f(x)) / f(sigma)) ** 2) / denom
    loss_y = jnp.sum(m * (f(y_hat) - f(x)) ** 2) / denom
    return loss_x + loss_y, loss_x, loss_y


def _check(out, ref, rtol, atol):
    for a, b in zip(out, ref):
        assert jnp.allclose(a, b, rtol=rtol, atol=atol), (a, b)


if __name__ == "__main__":
    loss_fn = jax.jit(masked_denoising_loss)

    # --- main test: small NCHW f32 tensors (no-pad, no-mask fast path) ---
    B, C, H, W = 2, 4, 16, 16
    key = jax.random.PRNGKey(0)
    k1, k2, k3, k4, k5 = jax.random.split(key, 5)
    x = jax.random.normal(k1, (B, C, H, W), dtype=jnp.float32)
    x_hat = x + 0.1 * jax.random.normal(k2, (B, C, H, W), dtype=jnp.float32)
    y_hat = x + 0.2 * jax.random.normal(k3, (B, C, H, W), dtype=jnp.float32)
    sigma = 0.5 + jax.random.uniform(k4, (B, C, H, W), dtype=jnp.float32)
    mask_f = (jax.random.uniform(k5, (B, C, H, W)) > 0.3).astype(jnp.float32)

    out = loss_fn(x_hat, y_hat, x, sigma, mask_f)
    jax.block_until_ready(out)
    _check(out, _reference(x_hat, y_hat, x, sigma, mask_f), 1e-5, 1e-5)

    # --- ragged path (n not a multiple of 128) + bool mask streamed as int8 ---
    shp = (3, 5, 7)
    kk = jax.random.split(jax.random.PRNGKey(1), 5)
    x2 = jax.random.normal(kk[0], shp, dtype=jnp.float32)
    xh2 = x2 + 0.1 * jax.random.normal(kk[1], shp, dtype=jnp.float32)
    yh2 = x2 + 0.2 * jax.random.normal(kk[2], shp, dtype=jnp.float32)
    sg2 = 0.5 + jax.random.uniform(kk[3], shp, dtype=jnp.float32)
    mk2 = jax.random.uniform(kk[4], shp) > 0.3
    out2 = loss_fn(xh2, yh2, x2, sg2, mk2)
    jax.block_until_ready(out2)
    _check(out2, _reference(xh2, yh2, x2, sg2, mk2.astype(jnp.float32)),
           1e-5, 1e-5)

    # --- bf16 inputs (cast in-register) + bool mask ---
    mask_b = mask_f.astype(jnp.bool_)
    out3 = loss_fn(x_hat.astype(jnp.bfloat16), y_hat.astype(jnp.bfloat16),
                   x.astype(jnp.bfloat16), sigma.astype(jnp.bfloat16), mask_b)
    jax.block_until_ready(out3)
    ref3 = _reference(x_hat.astype(jnp.bfloat16), y_hat.astype(jnp.bfloat16),
                      x.astype(jnp.bfloat16), sigma.astype(jnp.bfloat16), mask_f)
    _check(out3, ref3, 1e-3, 1e-5)

    # --- multi-tile path: partial last block + megacore overhang/clamp ---
    shp4 = (3, 700, 128)       # 268800 elems -> 2100 rows -> 3 tiles, 2 splits
    kq = jax.random.split(jax.random.PRNGKey(2), 5)
    x4 = jax.random.normal(kq[0], shp4, dtype=jnp.float32)
    xh4 = x4 + 0.1 * jax.random.normal(kq[1], shp4, dtype=jnp.float32)
    yh4 = x4 + 0.2 * jax.random.normal(kq[2], shp4, dtype=jnp.float32)
    sg4 = 0.5 + jax.random.uniform(kq[3], shp4, dtype=jnp.float32)
    mk4 = (jax.random.uniform(kq[4], shp4) > 0.3).astype(jnp.float32)
    out4 = loss_fn(xh4, yh4, x4, sg4, mk4)
    jax.block_until_ready(out4)
    _check(out4, _reference(xh4, yh4, x4, sg4, mk4), 1e-5, 1e-5)

    print("KERNEL_OK")
</pallas_src>

<mosaic_0001>
module attributes {stable_mosaic.version = 11 : i64} {
  func.func @kernel(%arg0: i32, %arg1: i32, %arg2: memref<16x128xf32, #tpu.memory_space<vmem>>, %arg3: memref<16x128xf32, #tpu.memory_space<vmem>>, %arg4: memref<16x128xf32, #tpu.memory_space<vmem>>, %arg5: memref<16x128xf32, #tpu.memory_space<vmem>>, %arg6: memref<16x128xf32, #tpu.memory_space<vmem>>, %arg7: memref<1x1x128xf32, #tpu.memory_space<vmem>>, %arg8: memref<1x1x128xf32, #tpu.memory_space<vmem>>, %arg9: memref<1x1x128xf32, #tpu.memory_space<vmem>>) attributes {dimension_semantics = [#tpu.dimension_semantics<parallel>, #tpu.dimension_semantics<arbitrary>], iteration_bounds = array<i64: 1, 1>, scalar_prefetch = 0 : i64, scratch_operands = 0 : i64, tpu.core_type = #tpu.core_type<tc>, window_params = [{transform_indices = @transform_0, window_bounds = array<i64: 16, 128>}, {transform_indices = @transform_1, window_bounds = array<i64: 16, 128>}, {transform_indices = @transform_2, window_bounds = array<i64: 16, 128>}, {transform_indices = @transform_3, window_bounds = array<i64: 16, 128>}, {transform_indices = @transform_4, window_bounds = array<i64: 16, 128>}, {transform_indices = @transform_5, window_bounds = array<i64: 1, 1, 128>}, {transform_indices = @transform_6, window_bounds = array<i64: 1, 1, 128>}, {transform_indices = @transform_7, window_bounds = array<i64: 1, 1, 128>}]} {
    %c0_i32 = arith.constant 0 : i32
    %0 = arith.cmpi eq, %arg1, %c0_i32 : i32
    %1 = arith.extui %0 : i1 to i32
    %c0_i32_0 = arith.constant 0 : i32
    %2 = arith.cmpi ne, %1, %c0_i32_0 : i32
    scf.if %2 {
      %cst_30 = arith.constant 0.000000e+00 : f32
      %40 = vector.broadcast %cst_30 : f32 to vector<1x128xf32>
      %c0_31 = arith.constant 0 : index
      %c0_32 = arith.constant 0 : index
      %c0_33 = arith.constant 0 : index
      %41 = vector.load %arg7[%c0_31, %c0_32, %c0_33] : memref<1x1x128xf32, #tpu.memory_space<vmem>>, vector<1x1x128xf32>
      %42 = vector.shape_cast %41 : vector<1x1x128xf32> to vector<1x128xf32>
      %43 = vector.shape_cast %40 : vector<1x128xf32> to vector<1x1x128xf32>
      tpu.vector_store %arg7[%c0_31, %c0_32, %c0_33], %43 {strides = array<i32>} : memref<1x1x128xf32, #tpu.memory_space<vmem>>, vector<1x1x128xf32>,
      %cst_34 = arith.constant 0.000000e+00 : f32
      %44 = vector.broadcast %cst_34 : f32 to vector<1x128xf32>
      %c0_35 = arith.constant 0 : index
      %c0_36 = arith.constant 0 : index
      %c0_37 = arith.constant 0 : index
      %45 = vector.load %arg8[%c0_35, %c0_36, %c0_37] : memref<1x1x128xf32, #tpu.memory_space<vmem>>, vector<1x1x128xf32>
      %46 = vector.shape_cast %45 : vector<1x1x128xf32> to vector<1x128xf32>
      %47 = vector.shape_cast %44 : vector<1x128xf32> to vector<1x1x128xf32>
      tpu.vector_store %arg8[%c0_35, %c0_36, %c0_37], %47 {strides = array<i32>} : memref<1x1x128xf32, #tpu.memory_space<vmem>>, vector<1x1x128xf32>,
      %cst_38 = arith.constant 0.000000e+00 : f32
      %48 = vector.broadcast %cst_38 : f32 to vector<1x128xf32>
      %c0_39 = arith.constant 0 : index
      %c0_40 = arith.constant 0 : index
      %c0_41 = arith.constant 0 : index
      %49 = vector.load %arg9[%c0_39, %c0_40, %c0_41] : memref<1x1x128xf32, #tpu.memory_space<vmem>>, vector<1x1x128xf32>
      %50 = vector.shape_cast %49 : vector<1x1x128xf32> to vector<1x128xf32>
      %51 = vector.shape_cast %48 : vector<1x128xf32> to vector<1x1x128xf32>
      tpu.vector_store %arg9[%c0_39, %c0_40, %c0_41], %51 {strides = array<i32>} : memref<1x1x128xf32, #tpu.memory_space<vmem>>, vector<1x1x128xf32>,
    } else {
    }
    %c0 = arith.constant 0 : index
    %c0_1 = arith.constant 0 : index
    %3 = vector.load %arg2[%c0, %c0_1] : memref<16x128xf32, #tpu.memory_space<vmem>>, vector<16x128xf32>
    %c0_2 = arith.constant 0 : index
    %c0_3 = arith.constant 0 : index
    %4 = vector.load %arg3[%c0_2, %c0_3] : memref<16x128xf32, #tpu.memory_space<vmem>>, vector<16x128xf32>
    %c0_4 = arith.constant 0 : index
    %c0_5 = arith.constant 0 : index
    %5 = vector.load %arg4[%c0_4, %c0_5] : memref<16x128xf32, #tpu.memory_space<vmem>>, vector<16x128xf32>
    %c0_6 = arith.constant 0 : index
    %c0_7 = arith.constant 0 : index
    %6 = vector.load %arg5[%c0_6, %c0_7] : memref<16x128xf32, #tpu.memory_space<vmem>>, vector<16x128xf32>
    %c0_8 = arith.constant 0 : index
    %c0_9 = arith.constant 0 : index
    %7 = vector.load %arg6[%c0_8, %c0_9] : memref<16x128xf32, #tpu.memory_space<vmem>>, vector<16x128xf32>
    %8 = tpu.reciprocal %6 : vector<16x128xf32> -> vector<16x128xf32>
    %9 = arith.subf %3, %5 : vector<16x128xf32>
    %10 = arith.mulf %9, %8 : vector<16x128xf32>
    %11 = arith.subf %4, %5 : vector<16x128xf32>
    %12 = arith.mulf %7, %10 : vector<16x128xf32>
    %13 = arith.mulf %12, %10 : vector<16x128xf32>
    %14 = arith.mulf %7, %11 : vector<16x128xf32>
    %15 = arith.mulf %14, %11 : vector<16x128xf32>
    %c0_10 = arith.constant 0 : index
    %c0_11 = arith.constant 0 : index
    %c0_12 = arith.constant 0 : index
    %16 = vector.load %arg7[%c0_10, %c0_11, %c0_12] : memref<1x1x128xf32, #tpu.memory_space<vmem>>, vector<1x1x128xf32>
    %17 = vector.shape_cast %16 : vector<1x1x128xf32> to vector<1x128xf32>
    %cst = arith.constant dense<0.000000e+00> : vector<128xf32>
    %18 = vector.multi_reduction <add>, %13, %cst [0] : vector<16x128xf32> to vector<128xf32>
    %19 = vector.shape_cast %18 : vector<128xf32> to vector<1x128xf32>
    %20 = arith.addf %17, %19 : vector<1x128xf32>
    %c0_13 = arith.constant 0 : index
    %c0_14 = arith.constant 0 : index
    %c0_15 = arith.constant 0 : index
    %21 = vector.load %arg7[%c0_13, %c0_14, %c0_15] : memref<1x1x128xf32, #tpu.memory_space<vmem>>, vector<1x1x128xf32>
    %22 = vector.shape_cast %21 : vector<1x1x128xf32> to vector<1x128xf32>
    %23 = vector.shape_cast %20 : vector<1x128xf32> to vector<1x1x128xf32>
    tpu.vector_store %arg7[%c0_13, %c0_14, %c0_15], %23 {strides = array<i32>} : memref<1x1x128xf32, #tpu.memory_space<vmem>>, vector<1x1x128xf32>,
    %c0_16 = arith.constant 0 : index
    %c0_17 = arith.constant 0 : index
    %c0_18 = arith.constant 0 : index
    %24 = vector.load %arg8[%c0_16, %c0_17, %c0_18] : memref<1x1x128xf32, #tpu.memory_space<vmem>>, vector<1x1x128xf32>
    %25 = vector.shape_cast %24 : vector<1x1x128xf32> to vector<1x128xf32>
    %cst_19 = arith.constant dense<0.000000e+00> : vector<128xf32>
    %26 = vector.multi_reduction <add>, %15, %cst_19 [0] : vector<16x128xf32> to vector<128xf32>
    %27 = vector.shape_cast %26 : vector<128xf32> to vector<1x128xf32>
    %28 = arith.addf %25, %27 : vector<1x128xf32>
    %c0_20 = arith.constant 0 : index
    %c0_21 = arith.constant 0 : index
    %c0_22 = arith.constant 0 : index
    %29 = vector.load %arg8[%c0_20, %c0_21, %c0_22] : memref<1x1x128xf32, #tpu.memory_space<vmem>>, vector<1x1x128xf32>
    %30 = vector.shape_cast %29 : vector<1x1x128xf32> to vector<1x128xf32>
    %31 = vector.shape_cast %28 : vector<1x128xf32> to vector<1x1x128xf32>
    tpu.vector_store %arg8[%c0_20, %c0_21, %c0_22], %31 {strides = array<i32>} : memref<1x1x128xf32, #tpu.memory_space<vmem>>, vector<1x1x128xf32>,
    %c0_23 = arith.constant 0 : index
    %c0_24 = arith.constant 0 : index
    %c0_25 = arith.constant 0 : index
    %32 = vector.load %arg9[%c0_23, %c0_24, %c0_25] : memref<1x1x128xf32, #tpu.memory_space<vmem>>, vector<1x1x128xf32>
    %33 = vector.shape_cast %32 : vector<1x1x128xf32> to vector<1x128xf32>
    %cst_26 = arith.constant dense<0.000000e+00> : vector<128xf32>
    %34 = vector.multi_reduction <add>, %7, %cst_26 [0] : vector<16x128xf32> to vector<128xf32>
    %35 = vector.shape_cast %34 : vector<128xf32> to vector<1x128xf32>
    %36 = arith.addf %33, %35 : vector<1x128xf32>
    %c0_27 = arith.constant 0 : index
    %c0_28 = arith.constant 0 : index
    %c0_29 = arith.constant 0 : index
    %37 = vector.load %arg9[%c0_27, %c0_28, %c0_29] : memref<1x1x128xf32, #tpu.memory_space<vmem>>, vector<1x1x128xf32>
    %38 = vector.shape_cast %37 : vector<1x1x128xf32> to vector<1x128xf32>
    %39 = vector.shape_cast %36 : vector<1x128xf32> to vector<1x1x128xf32>
    tpu.vector_store %arg9[%c0_27, %c0_28, %c0_29], %39 {strides = array<i32>} : memref<1x1x128xf32, #tpu.memory_space<vmem>>, vector<1x1x128xf32>,
    return
  }
  func.func @transform_0(%arg0: i32, %arg1: i32) -> (i32, i32) {
    %c1_i32 = arith.constant 1 : i32
    %0 = arith.muli %arg0, %c1_i32 : i32
    %1 = arith.addi %0, %arg1 : i32
    %c0_i32 = arith.constant 0 : i32
    %c0_i32_0 = arith.constant 0 : i32
    return %1, %c0_i32 : i32, i32
  }
  func.func @transform_1(%arg0: i32, %arg1: i32) -> (i32, i32) {
    %c1_i32 = arith.constant 1 : i32
    %0 = arith.muli %arg0, %c1_i32 : i32
    %1 = arith.addi %0, %arg1 : i32
    %c0_i32 = arith.constant 0 : i32
    %c0_i32_0 = arith.constant 0 : i32
    return %1, %c0_i32 : i32, i32
  }
  func.func @transform_2(%arg0: i32, %arg1: i32) -> (i32, i32) {
    %c1_i32 = arith.constant 1 : i32
    %0 = arith.muli %arg0, %c1_i32 : i32
    %1 = arith.addi %0, %arg1 : i32
    %c0_i32 = arith.constant 0 : i32
    %c0_i32_0 = arith.constant 0 : i32
    return %1, %c0_i32 : i32, i32
  }
  func.func @transform_3(%arg0: i32, %arg1: i32) -> (i32, i32) {
    %c1_i32 = arith.constant 1 : i32
    %0 = arith.muli %arg0, %c1_i32 : i32
    %1 = arith.addi %0, %arg1 : i32
    %c0_i32 = arith.constant 0 : i32
    %c0_i32_0 = arith.constant 0 : i32
    return %1, %c0_i32 : i32, i32
  }
  func.func @transform_4(%arg0: i32, %arg1: i32) -> (i32, i32) {
    %c1_i32 = arith.constant 1 : i32
    %0 = arith.muli %arg0, %c1_i32 : i32
    %1 = arith.addi %0, %arg1 : i32
    %c0_i32 = arith.constant 0 : i32
    %c0_i32_0 = arith.constant 0 : i32
    return %1, %c0_i32 : i32, i32
  }
  func.func @transform_5(%arg0: i32, %arg1: i32) -> (i32, i32, i32) {
    %c0_i32 = arith.constant 0 : i32
    %c0_i32_0 = arith.constant 0 : i32
    %c0_i32_1 = arith.constant 0 : i32
    return %arg0, %c0_i32, %c0_i32_0 : i32, i32, i32
  }
  func.func @transform_6(%arg0: i32, %arg1: i32) -> (i32, i32, i32) {
    %c0_i32 = arith.constant 0 : i32
    %c0_i32_0 = arith.constant 0 : i32
    %c0_i32_1 = arith.constant 0 : i32
    return %arg0, %c0_i32, %c0_i32_0 : i32, i32, i32
  }
  func.func @transform_7(%arg0: i32, %arg1: i32) -> (i32, i32, i32) {
    %c0_i32 = arith.constant 0 : i32
    %c0_i32_0 = arith.constant 0 : i32
    %c0_i32_1 = arith.constant 0 : i32
    return %arg0, %c0_i32, %c0_i32_0 : i32, i32, i32
  }
}

</mosaic_0001>

<llo_original>
// kernel: masked_denoising_loss.1
$region0: #{masked_denoising_loss.1}
  #allocation0 [shape = 'u32[]', space=smem, size = 0x4, offset = 0x4, fixed_abs, tag = 'smem constant byte address 0x4 - core index']
  #allocation1 [shape = 'u32[144,128]{1,0:T(1,128)}', space=vmem, size = 0x12000, scoped, tag = 'internal scratch']
  %s0 = inlined_call_operand.vmem [shape: f32[16,128], index: 0, kind: input, shape index: {}]
  %s1 = inlined_call_operand.vmem [shape: f32[16,128], index: 1, kind: input, shape index: {}]
  %s2 = inlined_call_operand.vmem [shape: f32[16,128], index: 2, kind: input, shape index: {}]
  %s3 = inlined_call_operand.vmem [shape: f32[16,128], index: 3, kind: input, shape index: {}]
  %s4 = inlined_call_operand.vmem [shape: f32[16,128], index: 4, kind: input, shape index: {}]
  %s5 = inlined_call_operand.vmem [shape: f32[1,1,128], index: 5, kind: output, shape index: {0}]
  %s6 = inlined_call_operand.vmem [shape: f32[1,1,128], index: 6, kind: output, shape index: {1}]
  %s7 = inlined_call_operand.vmem [shape: f32[1,1,128], index: 7, kind: output, shape index: {2}]
  %8 = xla_tuple %s5, %s6, %s7
  %s9 = sld [smem:[#allocation0]]
  $region50: #{masked_denoising_loss.1} parent=0
    _
  %s11 = ssub.s32 1, %s9
  %s12 = scalar_select 0, %s11, %s9
  // Predicated region
  $region2: #{masked_denoising_loss.1} parent=0 // pred_check
    _
  $region3: #{masked_denoising_loss.1} parent=0 // pred_check_branch
    %14 = sbr.rel (0) target = $region5
  $region4: #{masked_denoising_loss.1} parent=0 // pred_region
    %s15 = sadd.s32 0, 0
    %s16 = smul.u32 2, %s15
    %p17 = scmp.lt.s32.totalorder %s16, 1
    %s18 = scalar_select %p17, %s16, 1
    %s19 = smul.addr %s18, 8
    %s20 = scalar_lea.vmem %s0, %s19
    %s21 = sadd.s32 0, 0
    %s22 = smul.u32 2, %s21
  $region5: #{masked_denoising_loss.1} parent=0 // pred_fallthru
    _
  // Predicated region
  $region6: #{masked_denoising_loss.1} parent=0 // pred_check
    _
  $region7: #{masked_denoising_loss.1} parent=0 // pred_check_branch
    %24 = sbr.rel (0) target = $region9
  $region8: #{masked_denoising_loss.1} parent=0 // pred_region
    %s25 = sadd.s32 0, 0
    %s26 = smul.u32 2, %s25
    %p27 = scmp.lt.s32.totalorder %s26, 1
    %s28 = scalar_select %p27, %s26, 1
    %s29 = smul.addr %s28, 8
    %s30 = scalar_lea.vmem %s1, %s29
    %s31 = sadd.s32 0, 0
    %s32 = smul.u32 2, %s31
  $region9: #{masked_denoising_loss.1} parent=0 // pred_fallthru
    _
  // Predicated region
  $region10: #{masked_denoising_loss.1} parent=0 // pred_check
    _
  $region11: #{masked_denoising_loss.1} parent=0 // pred_check_branch
    %34 = sbr.rel (0) target = $region13
  $region12: #{masked_denoising_loss.1} parent=0 // pred_region
    %s35 = sadd.s32 0, 0
    %s36 = smul.u32 2, %s35
    %p37 = scmp.lt.s32.totalorder %s36, 1
    %s38 = scalar_select %p37, %s36, 1
    %s39 = smul.addr %s38, 8
    %s40 = scalar_lea.vmem %s2, %s39
    %s41 = sadd.s32 0, 0
    %s42 = smul.u32 2, %s41
  $region13: #{masked_denoising_loss.1} parent=0 // pred_fallthru
    _
  // Predicated region
  $region14: #{masked_denoising_loss.1} parent=0 // pred_check
    _
  $region15: #{masked_denoising_loss.1} parent=0 // pred_check_branch
    %44 = sbr.rel (0) target = $region17
  $region16: #{masked_denoising_loss.1} parent=0 // pred_region
    %s45 = sadd.s32 0, 0
    %s46 = smul.u32 2, %s45
    %p47 = scmp.lt.s32.totalorder %s46, 1
    %s48 = scalar_select %p47, %s46, 1
    %s49 = smul.addr %s48, 8
    %s50 = scalar_lea.vmem %s3, %s49
    %s51 = sadd.s32 0, 0
    %s52 = smul.u32 2, %s51
  $region17: #{masked_denoising_loss.1} parent=0 // pred_fallthru
    _
  // Predicated region
  $region18: #{masked_denoising_loss.1} parent=0 // pred_check
    _
  $region19: #{masked_denoising_loss.1} parent=0 // pred_check_branch
    %54 = sbr.rel (0) target = $region21
  $region20: #{masked_denoising_loss.1} parent=0 // pred_region
    %s55 = sadd.s32 0, 0
    %s56 = smul.u32 2, %s55
    %p57 = scmp.lt.s32.totalorder %s56, 1
    %s58 = scalar_select %p57, %s56, 1
    %s59 = smul.addr %s58, 8
    %s60 = scalar_lea.vmem %s4, %s59
    %s61 = sadd.s32 0, 0
    %s62 = smul.u32 2, %s61
  $region21: #{masked_denoising_loss.1} parent=0 // pred_fallthru
    _
  %s63 = sadd.s32 0, 0
  %s64 = smul.u32 2, %s63
  %p65 = scmp.lt.s32.totalorder %s64, 1
  %s66 = scalar_select %p65, %s64, 1
  %s67 = smul.addr %s66, 8
  %s68 = scalar_lea.vmem %s0, %s67
  %s69 = sadd.s32 0, 0
  %s70 = smul.u32 2, %s69
  %p71 = scmp.lt.s32.totalorder %s70, 1
  %s72 = scalar_select %p71, %s70, 1
  %s73 = smul.addr %s72, 8
  %s74 = scalar_lea.vmem %s1, %s73
  %s75 = sadd.s32 0, 0
  %s76 = smul.u32 2, %s75
  %p77 = scmp.lt.s32.totalorder %s76, 1
  %s78 = scalar_select %p77, %s76, 1
  %s79 = smul.addr %s78, 8
  %s80 = scalar_lea.vmem %s2, %s79
  %s81 = sadd.s32 0, 0
  %s82 = smul.u32 2, %s81
  %p83 = scmp.lt.s32.totalorder %s82, 1
  %s84 = scalar_select %p83, %s82, 1
  %s85 = smul.addr %s84, 8
  %s86 = scalar_lea.vmem %s3, %s85
  %s87 = sadd.s32 0, 0
  %s88 = smul.u32 2, %s87
  %p89 = scmp.lt.s32.totalorder %s88, 1
  %s90 = scalar_select %p89, %s88, 1
  %s91 = smul.addr %s90, 8
  %s92 = scalar_lea.vmem %s4, %s91
  %s93 = sadd.s32 0, 0
  %s94 = smul.u32 2, %s93
  %p95 = scmp.lt.s32.totalorder %s94, 1
  %s96 = scalar_select %p95, %s94, 1
  %s97 = smul.addr %s96, 8
  %s98 = scalar_lea.vmem %s0, %s97
  %s99 = sadd.s32 0, 0
  %s100 = smul.u32 2, %s99
  %s101 = sadd.s32 0, 0
  %s102 = smul.u32 2, %s101
  %p103 = scmp.lt.s32.totalorder %s102, 1
  %s104 = scalar_select %p103, %s102, 1
  %s105 = smul.addr %s104, 8
  %s106 = scalar_lea.vmem %s1, %s105
  %s107 = sadd.s32 0, 0
  %s108 = smul.u32 2, %s107
  %s109 = sadd.s32 0, 0
  %s110 = smul.u32 2, %s109
  %p111 = scmp.lt.s32.totalorder %s110, 1
  %s112 = scalar_select %p111, %s110, 1
  %s113 = smul.addr %s112, 8
  %s114 = scalar_lea.vmem %s2, %s113
  %s115 = sadd.s32 0, 0
  %s116 = smul.u32 2, %s115
  %s117 = sadd.s32 0, 0
  %s118 = smul.u32 2, %s117
  %p119 = scmp.lt.s32.totalorder %s118, 1
  %s120 = scalar_select %p119, %s118, 1
  %s121 = smul.addr %s120, 8
  %s122 = scalar_lea.vmem %s3, %s121
  %s123 = sadd.s32 0, 0
  %s124 = smul.u32 2, %s123
  %s125 = sadd.s32 0, 0
  %s126 = smul.u32 2, %s125
  %p127 = scmp.lt.s32.totalorder %s126, 1
  %s128 = scalar_select %p127, %s126, 1
  %s129 = smul.addr %s128, 8
  %s130 = scalar_lea.vmem %s4, %s129
  %s131 = sadd.s32 0, 0
  %s132 = smul.u32 2, %s131
  %p133 = scmp.eq.s32.totalorder 0, 0
  // Predicated region
  $region22: #{masked_denoising_loss.1} parent=0 // pred_check
    %p134 = pneg %p133
  $region23: #{masked_denoising_loss.1} parent=0 // pred_check_branch
    %136 = sbr.rel (%p134) target = $region25
  $region24: #{masked_denoising_loss.1} parent=0 // pred_region
    %137 = vst [vmem:[%s5] sm:$0x1] 0.0
    %138 = vst [vmem:[%s6] sm:$0x1] 0.0
    %139 = vst [vmem:[%s7] sm:$0x1] 0.0
  $region25: #{masked_denoising_loss.1} parent=0 // pred_fallthru
    _
  %v140 = vld [vmem:[%s98] sm:$0xff]
  %v141 = vld [vmem:[%s98 + $0x8] sm:$0xff]
  %v142 = vld [vmem:[%s106] sm:$0xff]
  %v143 = vld [vmem:[%s106 + $0x8] sm:$0xff]
  %v144 = vld [vmem:[%s114] sm:$0xff]
  %v145 = vld [vmem:[%s114 + $0x8] sm:$0xff]
  %v146 = vld [vmem:[%s122] sm:$0xff]
  %v147 = vld [vmem:[%s122 + $0x8] sm:$0xff]
  %v148 = vld [vmem:[%s130] sm:$0xff]
  %v149 = vld [vmem:[%s130 + $0x8] sm:$0xff]
  %v150 = vrcp.pop %v146
  %v151 = vrcp.pop %v147
  %v152 = vsub.f32 %v140, %v144
  %v153 = vsub.f32 %v141, %v145
  %v154 = vmul.f32 %v152, %v150
  %v155 = vmul.f32 %v153, %v151
  %v156 = vsub.f32 %v142, %v144
  %v157 = vsub.f32 %v143, %v145
  %v158 = vmul.f32 %v148, %v154
  %v159 = vmul.f32 %v149, %v155
  %v160 = vmul.f32 %v158, %v154
  %v161 = vmul.f32 %v159, %v155
  %v162 = vmul.f32 %v148, %v156
  %v163 = vmul.f32 %v149, %v157
  %v164 = vmul.f32 %v162, %v156
  %v165 = vmul.f32 %v163, %v157
  %v166 = vld [vmem:[%s5] sm:$0x1]
  %v167 = vadd.f32 %v160, %v161
  %v168 = vrot.slane %v167, 4
  %v169 = vadd.f32 %v167, %v168
  %v170 = vrot.slane %v169, 2
  %v171 = vadd.f32 %v169, %v170
  %v172 = vrot.slane %v171, 1
  %v173 = vadd.f32 %v171, %v172
  %v174 = vadd.f32 %v166, %v173
  %175 = vst [vmem:[%s5] sm:$0x1] %v174
  %v176 = vld [vmem:[%s6] sm:$0x1]
  %v177 = vadd.f32 %v164, %v165
  %v178 = vrot.slane %v177, 4
  %v179 = vadd.f32 %v177, %v178
  %v180 = vrot.slane %v179, 2
  %v181 = vadd.f32 %v179, %v180
  %v182 = vrot.slane %v181, 1
  %v183 = vadd.f32 %v181, %v182
  %v184 = vadd.f32 %v176, %v183
  %185 = vst [vmem:[%s6] sm:$0x1] %v184
  %v186 = vld [vmem:[%s7] sm:$0x1]
  %v187 = vadd.f32 %v148, %v149
  %v188 = vrot.slane %v187, 4
  %v189 = vadd.f32 %v187, %v188
  %v190 = vrot.slane %v189, 2
  %v191 = vadd.f32 %v189, %v190
  %v192 = vrot.slane %v191, 1
  %v193 = vadd.f32 %v191, %v192
  %v194 = vadd.f32 %v186, %v193
  %195 = vst [vmem:[%s7] sm:$0x1] %v194
  // Predicated region
  $region26: #{masked_denoising_loss.1} parent=0 // pred_check
    _
  $region27: #{masked_denoising_loss.1} parent=0 // pred_check_branch
    %197 = sbr.rel (0) target = $region29
  $region28: #{masked_denoising_loss.1} parent=0 // pred_region
    _
  $region29: #{masked_denoising_loss.1} parent=0 // pred_fallthru
    _
  // Predicated region
  $region30: #{masked_denoising_loss.1} parent=0 // pred_check
    _
  $region31: #{masked_denoising_loss.1} parent=0 // pred_check_branch
    %199 = sbr.rel (0) target = $region33
  $region32: #{masked_denoising_loss.1} parent=0 // pred_region
    _
  $region33: #{masked_denoising_loss.1} parent=0 // pred_fallthru
    _
  // Predicated region
  $region34: #{masked_denoising_loss.1} parent=0 // pred_check
    _
  $region35: #{masked_denoising_loss.1} parent=0 // pred_check_branch
    %201 = sbr.rel (0) target = $region37
  $region36: #{masked_denoising_loss.1} parent=0 // pred_region
    _
  $region37: #{masked_denoising_loss.1} parent=0 // pred_fallthru
    _
  // Predicated region
  $region38: #{masked_denoising_loss.1} parent=0 // pred_check
    _
  $region39: #{masked_denoising_loss.1} parent=0 // pred_check_branch
    %203 = sbr.rel (0) target = $region41
  $region40: #{masked_denoising_loss.1} parent=0 // pred_region
    _
  $region41: #{masked_denoising_loss.1} parent=0 // pred_fallthru
    _
  // Predicated region
  $region42: #{masked_denoising_loss.1} parent=0 // pred_check
    _
  $region43: #{masked_denoising_loss.1} parent=0 // pred_check_branch
    %205 = sbr.rel (0) target = $region45
  $region44: #{masked_denoising_loss.1} parent=0 // pred_region
    _
  $region45: #{masked_denoising_loss.1} parent=0 // pred_fallthru
    _
  // Predicated region
  $region46: #{masked_denoising_loss.1} parent=0 // pred_check
    _
  $region47: #{masked_denoising_loss.1} parent=0 // pred_check_branch
    %207 = sbr.rel (0) target = $region49
  $region48: #{masked_denoising_loss.1} parent=0 // pred_region
    _
  $region49: #{masked_denoising_loss.1} parent=0 // pred_fallthru
    _

</llo_original>
